<compile_context>
chip_gen: v7x
topology: tpu7x:2x2x1
jax: 0.10.0
libtpu: 0.0.40
codegen_flags: <defaults>
</compile_context>

<pallas_src>
import jax
import jax.numpy as jnp
from jax.experimental import pallas as pl
from jax.experimental.pallas import tpu as pltpu

TB = 128  # batch rows per grid step (multiple of 128 for the lane-dense output)


def mlp2h_kernel(x_ref, w1_ref, b1_ref, w2_ref, b2_ref, w3_ref, b3_ref, o_ref):
    x = x_ref[...]                                                 # (TB, D) f32

    # fc1 + ReLU  (MXU, f32 accumulation)
    h1 = jnp.dot(x, w1_ref[...], preferred_element_type=jnp.float32) + b1_ref[...]
    h1 = jnp.maximum(h1, 0.0)

    # fc2 + ReLU  (MXU, f32 accumulation)
    h2 = jnp.dot(h1, w2_ref[...], preferred_element_type=jnp.float32) + b2_ref[...]
    h2 = jnp.maximum(h2, 0.0)

    # out layer: N=1 -> VPU multiply + cross-lane reduction instead of an MXU
    # pass that would use 1/128..1/256 of the output lanes.
    y = jnp.sum(h2 * w3_ref[...], axis=-1, keepdims=True) + b3_ref[0]  # (TB, 1)

    # Lane-dense store: (TB, 1) -> (1, TB//128, 128).
    o_ref[...] = jnp.reshape(y, o_ref.shape).astype(o_ref.dtype)


def mlp2h_forward(x, params):
    """x: [B, input_size] float32.  Returns [B, 1] float32."""
    w1, b1, w2, b2, w3, b3 = params
    B, D = x.shape

    num_tiles = pl.cdiv(B, TB)
    Bp = num_tiles * TB
    if Bp != B:
        x = jnp.pad(x, ((0, Bp - B), (0, 0)))

    # Weights/biases: full-array blocks whose index_map is constant -> the
    # buffers are DMA'd once and stay resident in VMEM across the batch grid.
    resident = lambda a: pl.BlockSpec(a.shape, lambda i, _nd=a.ndim: (0,) * _nd)

    out3 = pl.pallas_call(
        mlp2h_kernel,
        out_shape=jax.ShapeDtypeStruct((num_tiles, TB // 128, 128), jnp.float32),
        grid=(num_tiles,),
        in_specs=[
            pl.BlockSpec((TB, D), lambda i: (i, 0)),                 # x tile
            resident(w1), resident(b1),                              # fc1
            resident(w2), resident(b2),                              # fc2
            resident(w3),                                            # out weight (1, h2)
            pl.BlockSpec(memory_space=pltpu.MemorySpace.SMEM),       # b3 scalar
        ],
        out_specs=pl.BlockSpec((1, TB // 128, 128), lambda i: (i, 0, 0)),
        compiler_params=pltpu.CompilerParams(
            dimension_semantics=("parallel",)),
    )(x, w1, b1, w2, b2, w3, b3)

    return out3.reshape(Bp, 1)[:B]


def init_params(key, input_size, h1=32, h2=16):
    """Deterministic init matching nn.Linear shapes.

    w1/w2 stored pre-transposed as [in, out]; w3 kept in PyTorch's native
    (1, h2) layout for the VPU reduction; b3 is a 1-D scalar for SMEM.
    """
    ks = jax.random.split(key, 6)

    def uinit(k, fan_in, shape):
        bound = 1.0 / jnp.sqrt(fan_in)
        return jax.random.uniform(k, shape, jnp.float32, -bound, bound)

    w1 = uinit(ks[0], input_size, (input_size, h1))   # fc1.weight.T
    b1 = uinit(ks[1], input_size, (1, h1))            # fc1.bias
    w2 = uinit(ks[2], h1, (h1, h2))                   # fc2.weight.T
    b2 = uinit(ks[3], h1, (1, h2))                    # fc2.bias
    w3 = uinit(ks[4], h2, (1, h2))                    # out.weight  (native layout)
    b3 = uinit(ks[5], h2, (1,))                       # out.bias
    return (w1, b1, w2, b2, w3, b3)


def mlp2h_reference(x, params):
    w1, b1, w2, b2, w3, b3 = params
    h1 = jnp.maximum(x @ w1 + b1, 0.0)
    h2 = jnp.maximum(h1 @ w2 + b2, 0.0)
    return h2 @ w3.T + b3


if __name__ == "__main__":
    key = jax.random.PRNGKey(0)
    kx, kp = jax.random.split(key)

    # B not a multiple of TB -> exercises multi-step grid + padding path.
    batch, input_size = 300, 16
    x = jax.random.normal(kx, (batch, input_size), jnp.float32)
    params = init_params(kp, input_size, h1=32, h2=16)

    out = jax.block_until_ready(mlp2h_forward(x, params))
    ref = mlp2h_reference(x, params)

    assert out.shape == (batch, 1), out.shape
    assert jnp.allclose(out, ref, atol=1e-4, rtol=1e-4), \
        float(jnp.max(jnp.abs(out - ref)))

    print("KERNEL_OK")
</pallas_src>

<mosaic_0001>
module attributes {stable_mosaic.version = 11 : i64} {
  func.func @mlp2h_kernel(%arg0: i32, %arg1: memref<128x16xf32, #tpu.memory_space<vmem>>, %arg2: memref<16x32xf32, #tpu.memory_space<vmem>>, %arg3: memref<1x32xf32, #tpu.memory_space<vmem>>, %arg4: memref<32x16xf32, #tpu.memory_space<vmem>>, %arg5: memref<1x16xf32, #tpu.memory_space<vmem>>, %arg6: memref<1x16xf32, #tpu.memory_space<vmem>>, %arg7: memref<1xf32, #tpu.memory_space<smem>>, %arg8: memref<1x1x128xf32, #tpu.memory_space<vmem>>) attributes {dimension_semantics = [#tpu.dimension_semantics<parallel>], iteration_bounds = array<i64: 3>, scalar_prefetch = 0 : i64, scratch_operands = 0 : i64, tpu.core_type = #tpu.core_type<tc>, window_params = [{transform_indices = @transform_0, window_bounds = array<i64: 128, 16>}, {pipeline_mode = #tpu.pipeline_mode<synchronous>, transform_indices = @transform_1, window_bounds = array<i64: 16, 32>}, {pipeline_mode = #tpu.pipeline_mode<synchronous>, transform_indices = @transform_2, window_bounds = array<i64: 1, 32>}, {pipeline_mode = #tpu.pipeline_mode<synchronous>, transform_indices = @transform_3, window_bounds = array<i64: 32, 16>}, {pipeline_mode = #tpu.pipeline_mode<synchronous>, transform_indices = @transform_4, window_bounds = array<i64: 1, 16>}, {pipeline_mode = #tpu.pipeline_mode<synchronous>, transform_indices = @transform_5, window_bounds = array<i64: 1, 16>}, {transform_indices = @transform_6, window_bounds = array<i64: 1>}, {transform_indices = @transform_7, window_bounds = array<i64: 1, 1, 128>}]} {
    %c0 = arith.constant 0 : index
    %c0_0 = arith.constant 0 : index
    %0 = vector.load %arg1[%c0, %c0_0] : memref<128x16xf32, #tpu.memory_space<vmem>>, vector<128x16xf32>
    %c0_1 = arith.constant 0 : index
    %c0_2 = arith.constant 0 : index
    %1 = vector.load %arg2[%c0_1, %c0_2] : memref<16x32xf32, #tpu.memory_space<vmem>>, vector<16x32xf32>
    %cst = arith.constant dense<0.000000e+00> : vector<128x32xf32>
    %2 = tpu.matmul %0, %1, %cst {dimension_numbers = #tpu.dot_dimension_numbers<[1], [0], [0], [1], [0, 0, 1, 1], [], []>} : vector<128x16xf32>, vector<16x32xf32>, vector<128x32xf32> -> vector<128x32xf32>
    %c0_3 = arith.constant 0 : index
    %c0_4 = arith.constant 0 : index
    %3 = vector.load %arg3[%c0_3, %c0_4] : memref<1x32xf32, #tpu.memory_space<vmem>>, vector<1x32xf32>
    %4 = vector.broadcast %3 : vector<1x32xf32> to vector<128x32xf32>
    %5 = arith.addf %2, %4 : vector<128x32xf32>
    %cst_5 = arith.constant 0.000000e+00 : f32
    %6 = vector.broadcast %cst_5 : f32 to vector<128x32xf32>
    %7 = arith.maximumf %5, %6 : vector<128x32xf32>
    %c0_6 = arith.constant 0 : index
    %c0_7 = arith.constant 0 : index
    %8 = vector.load %arg4[%c0_6, %c0_7] : memref<32x16xf32, #tpu.memory_space<vmem>>, vector<32x16xf32>
    %cst_8 = arith.constant dense<0.000000e+00> : vector<128x16xf32>
    %9 = tpu.matmul %7, %8, %cst_8 {dimension_numbers = #tpu.dot_dimension_numbers<[1], [0], [0], [1], [0, 0, 1, 1], [], []>} : vector<128x32xf32>, vector<32x16xf32>, vector<128x16xf32> -> vector<128x16xf32>
    %c0_9 = arith.constant 0 : index
    %c0_10 = arith.constant 0 : index
    %10 = vector.load %arg5[%c0_9, %c0_10] : memref<1x16xf32, #tpu.memory_space<vmem>>, vector<1x16xf32>
    %11 = vector.broadcast %10 : vector<1x16xf32> to vector<128x16xf32>
    %12 = arith.addf %9, %11 : vector<128x16xf32>
    %cst_11 = arith.constant 0.000000e+00 : f32
    %13 = vector.broadcast %cst_11 : f32 to vector<128x16xf32>
    %14 = arith.maximumf %12, %13 : vector<128x16xf32>
    %c0_12 = arith.constant 0 : index
    %c0_13 = arith.constant 0 : index
    %15 = vector.load %arg6[%c0_12, %c0_13] : memref<1x16xf32, #tpu.memory_space<vmem>>, vector<1x16xf32>
    %16 = vector.broadcast %15 : vector<1x16xf32> to vector<128x16xf32>
    %17 = arith.mulf %14, %16 : vector<128x16xf32>
    %cst_14 = arith.constant dense<0.000000e+00> : vector<128xf32>
    %18 = vector.multi_reduction <add>, %17, %cst_14 [1] : vector<128x16xf32> to vector<128xf32>
    %19 = vector.shape_cast %18 : vector<128xf32> to vector<128x1xf32>
    %c0_15 = arith.constant 0 : index
    %20 = memref.load %arg7[%c0_15] : memref<1xf32, #tpu.memory_space<smem>>
    %21 = vector.broadcast %20 : f32 to vector<128x1xf32>
    %22 = arith.addf %19, %21 : vector<128x1xf32>
    %23 = vector.shape_cast %22 : vector<128x1xf32> to vector<1x1x128xf32>
    %c0_16 = arith.constant 0 : index
    %c0_17 = arith.constant 0 : index
    %c0_18 = arith.constant 0 : index
    %24 = vector.load %arg8[%c0_16, %c0_17, %c0_18] : memref<1x1x128xf32, #tpu.memory_space<vmem>>, vector<1x1x128xf32>
    tpu.vector_store %arg8[%c0_16, %c0_17, %c0_18], %23 {strides = array<i32>} : memref<1x1x128xf32, #tpu.memory_space<vmem>>, vector<1x1x128xf32>,
    return
  }
  func.func @transform_0(%arg0: i32) -> (i32, i32) {
    %c0_i32 = arith.constant 0 : i32
    %c0_i32_0 = arith.constant 0 : i32
    return %arg0, %c0_i32 : i32, i32
  }
  func.func @transform_1(%arg0: i32) -> (i32, i32) {
    %c0_i32 = arith.constant 0 : i32
    %c0_i32_0 = arith.constant 0 : i32
    %c0_i32_1 = arith.constant 0 : i32
    return %c0_i32, %c0_i32_0 : i32, i32
  }
  func.func @transform_2(%arg0: i32) -> (i32, i32) {
    %c0_i32 = arith.constant 0 : i32
    %c0_i32_0 = arith.constant 0 : i32
    %c0_i32_1 = arith.constant 0 : i32
    return %c0_i32, %c0_i32_0 : i32, i32
  }
  func.func @transform_3(%arg0: i32) -> (i32, i32) {
    %c0_i32 = arith.constant 0 : i32
    %c0_i32_0 = arith.constant 0 : i32
    %c0_i32_1 = arith.constant 0 : i32
    return %c0_i32, %c0_i32_0 : i32, i32
  }
  func.func @transform_4(%arg0: i32) -> (i32, i32) {
    %c0_i32 = arith.constant 0 : i32
    %c0_i32_0 = arith.constant 0 : i32
    %c0_i32_1 = arith.constant 0 : i32
    return %c0_i32, %c0_i32_0 : i32, i32
  }
  func.func @transform_5(%arg0: i32) -> (i32, i32) {
    %c0_i32 = arith.constant 0 : i32
    %c0_i32_0 = arith.constant 0 : i32
    %c0_i32_1 = arith.constant 0 : i32
    return %c0_i32, %c0_i32_0 : i32, i32
  }
  func.func @transform_6(%arg0: i32) -> i32 {
    %c0_i32 = arith.constant 0 : i32
    %c0_i32_0 = arith.constant 0 : i32
    return %c0_i32 : i32
  }
  func.func @transform_7(%arg0: i32) -> (i32, i32, i32) {
    %c0_i32 = arith.constant 0 : i32
    %c0_i32_0 = arith.constant 0 : i32
    %c0_i32_1 = arith.constant 0 : i32
    return %arg0, %c0_i32, %c0_i32_0 : i32, i32, i32
  }
}

</mosaic_0001>

<llo_original>
// kernel: tpu_custom_call.1
$region0: #{tpu_custom_call.1}
  #allocation0 [shape = 'u32[]', space=smem, size = 0x4, offset = 0x4, fixed_abs, tag = 'smem constant byte address 0x4 - core index']
  #allocation1 [shape = 'u32[144,128]{1,0:T(1,128)}', space=vmem, size = 0x12000, scoped, tag = 'internal scratch']
  #allocation2 [shape = 'f32[1]{0:T(128)S(6)}', space=smem, size = 0x200, scoped, tag = 'scoped memory for tpu_custom_call.1']
  %s0 = inlined_call_operand.vmem [shape: f32[384,16], index: 0, kind: input, shape index: {}]
  %s1 = inlined_call_operand.vmem [shape: f32[16,32], index: 1, kind: input, shape index: {}]
  %s2 = inlined_call_operand.vmem [shape: f32[1,32], index: 2, kind: input, shape index: {}]
  %s3 = inlined_call_operand.vmem [shape: f32[32,16], index: 3, kind: input, shape index: {}]
  %s4 = inlined_call_operand.vmem [shape: f32[1,16], index: 4, kind: input, shape index: {}]
  %s5 = inlined_call_operand.vmem [shape: f32[1,16], index: 5, kind: input, shape index: {}]
  %s6 = inlined_call_operand.<no memory space> [shape: f32[1], index: 6, kind: input, shape index: {}]
  %s7 = inlined_call_operand.hbm [shape: f32[3,1,128], index: 7, kind: output, shape index: {}]
  %s8 = sld [smem:[#allocation0]]
  $region61: #{tpu_custom_call.1} parent=0
    _
  %s10 = ssub.s32 1, %s8
  %s11 = scalar_select 0, %s10, %s8
  %12 = sst [smem:[#allocation2]] %s6
  $region1: #{tpu_custom_call.1} parent=0
    #allocation3 [shape = 'u8[1024]{0}', space=vmem, size = 0x400, scoped, tag = 'output window, operand 0']
    #allocation4 [shape = 's32[2]{0}', space=sflag, size = 0x8, scoped, tag = 'scoped memory for tpu_custom_call.1']
    %13 = vsyncpa [#allocation4], 0
    %s14 = scalar_lea.sflag [#allocation4], 1
    %15 = vsyncpa %s14, 0
    loop: start=0, step=1, limit=5
    $region2: #{tpu_custom_call.1} parent=1 // loop_pre_header
      _
    $region3: #{tpu_custom_call.1} parent=1 // loop_header
      %s17 = sphi 0, %s21
      %p18 = scmp.ge.s32.totalorder %s17, 5
      %s27 = sphi 0, %s29
      %s30 = sphi 0, %s27
      %s31 = sphi 0, %s30
      %s47 = sphi 0, %s31
      %s51 = sphi 0, %s51
      %s53 = sphi 0, %s51
      %s54 = sphi 0, %s53
      %s68 = sphi 0, %s54
      %s72 = sphi 0, %s72
      %s74 = sphi 0, %s72
      %s75 = sphi 0, %s74
      %s89 = sphi 0, %s75
      %s93 = sphi 0, %s93
      %s95 = sphi 0, %s93
      %s96 = sphi 0, %s95
      %s110 = sphi 0, %s96
      %s114 = sphi 0, %s114
      %s116 = sphi 0, %s114
      %s117 = sphi 0, %s116
      %s131 = sphi 0, %s117
      %s135 = sphi 0, %s135
      %s137 = sphi 0, %s135
      %s138 = sphi 0, %s137
      %s152 = sphi 0, %s138
      %s156 = sphi 0, %s156
      %s158 = sphi 0, %s156
      %s159 = sphi 0, %s158
      %s173 = sphi 0, %s159
      %s179 = sphi 0, %s181
      %s182 = sphi 0, %s179
      %s183 = sphi 0, %s182
      %s199 = sphi 0, %s183
    $region4: #{tpu_custom_call.1} parent=1 // loop_header_branch
      %20 = sbr.rel (%p18) target = $region8
    $region5: #{tpu_custom_call.1} parent=1 // loop_body
      %s22 = ssub.s32 %s17, 1
      %s23 = ssub.s32 %s17, 2
      %s24 = sadd.s32 %s17, 1
      %s25 = ssub.s32 %s17, %s24
      %p26 = scmp.eq.s32.totalorder %s25, 0
      %s28 = sadd.s32 %s27, 1
      %s29 = scalar_select %p26, %s27, %s28
      %p32 = pneg %p26
      %p33 = scmp.eq.s32.totalorder %s17, 2
      %p34 = por %p32, %p33
      %p35 = scmp.ne.s32.totalorder %s27, %s30
      %p36 = scmp.eq.s32.totalorder %s17, 0
      %p37 = por %p35, %p36
      %p38 = scmp.ne.s32.totalorder %s27, %s30
      %p39 = scmp.eq.s32.totalorder %s22, 2
      %p40 = por %p38, %p39
      %p41 = scmp.ne.s32.totalorder %s30, %s31
      %p42 = scmp.eq.s32.totalorder %s22, 0
      %p43 = por %p41, %p42
      %p44 = scmp.ne.s32.totalorder %s30, %s31
      %p45 = scmp.eq.s32.totalorder %s23, 2
      %p46 = por %p44, %p45
      %p48 = scmp.ne.s32.totalorder %s31, %s47
      %p49 = scmp.eq.s32.totalorder %s23, 0
      %p50 = por %p48, %p49
      %s52 = sadd.s32 %s51, 1
      %p55 = scmp.eq.s32.totalorder %s17, 2
      %p56 = scmp.ne.s32.totalorder %s51, %s53
      %p57 = scmp.eq.s32.totalorder %s17, 0
      %p58 = por %p56, %p57
      %p59 = scmp.ne.s32.totalorder %s51, %s53
      %p60 = scmp.eq.s32.totalorder %s22, 2
      %p61 = por %p59, %p60
      %p62 = scmp.ne.s32.totalorder %s53, %s54
      %p63 = scmp.eq.s32.totalorder %s22, 0
      %p64 = por %p62, %p63
      %p65 = scmp.ne.s32.totalorder %s53, %s54
      %p66 = scmp.eq.s32.totalorder %s23, 2
      %p67 = por %p65, %p66
      %p69 = scmp.ne.s32.totalorder %s54, %s68
      %p70 = scmp.eq.s32.totalorder %s23, 0
      %p71 = por %p69, %p70
      %s73 = sadd.s32 %s72, 1
      %p76 = scmp.eq.s32.totalorder %s17, 2
      %p77 = scmp.ne.s32.totalorder %s72, %s74
      %p78 = scmp.eq.s32.totalorder %s17, 0
      %p79 = por %p77, %p78
      %p80 = scmp.ne.s32.totalorder %s72, %s74
      %p81 = scmp.eq.s32.totalorder %s22, 2
      %p82 = por %p80, %p81
      %p83 = scmp.ne.s32.totalorder %s74, %s75
      %p84 = scmp.eq.s32.totalorder %s22, 0
      %p85 = por %p83, %p84
      %p86 = scmp.ne.s32.totalorder %s74, %s75
      %p87 = scmp.eq.s32.totalorder %s23, 2
      %p88 = por %p86, %p87
      %p90 = scmp.ne.s32.totalorder %s75, %s89
      %p91 = scmp.eq.s32.totalorder %s23, 0
      %p92 = por %p90, %p91
      %s94 = sadd.s32 %s93, 1
      %p97 = scmp.eq.s32.totalorder %s17, 2
      %p98 = scmp.ne.s32.totalorder %s93, %s95
      %p99 = scmp.eq.s32.totalorder %s17, 0
      %p100 = por %p98, %p99
      %p101 = scmp.ne.s32.totalorder %s93, %s95
      %p102 = scmp.eq.s32.totalorder %s22, 2
      %p103 = por %p101, %p102
      %p104 = scmp.ne.s32.totalorder %s95, %s96
      %p105 = scmp.eq.s32.totalorder %s22, 0
      %p106 = por %p104, %p105
      %p107 = scmp.ne.s32.totalorder %s95, %s96
      %p108 = scmp.eq.s32.totalorder %s23, 2
      %p109 = por %p107, %p108
      %p111 = scmp.ne.s32.totalorder %s96, %s110
      %p112 = scmp.eq.s32.totalorder %s23, 0
      %p113 = por %p111, %p112
      %s115 = sadd.s32 %s114, 1
      %p118 = scmp.eq.s32.totalorder %s17, 2
      %p119 = scmp.ne.s32.totalorder %s114, %s116
      %p120 = scmp.eq.s32.totalorder %s17, 0
      %p121 = por %p119, %p120
      %p122 = scmp.ne.s32.totalorder %s114, %s116
      %p123 = scmp.eq.s32.totalorder %s22, 2
      %p124 = por %p122, %p123
      %p125 = scmp.ne.s32.totalorder %s116, %s117
      %p126 = scmp.eq.s32.totalorder %s22, 0
      %p127 = por %p125, %p126
      %p128 = scmp.ne.s32.totalorder %s116, %s117
      %p129 = scmp.eq.s32.totalorder %s23, 2
      %p130 = por %p128, %p129
      %p132 = scmp.ne.s32.totalorder %s117, %s131
      %p133 = scmp.eq.s32.totalorder %s23, 0
      %p134 = por %p132, %p133
      %s136 = sadd.s32 %s135, 1
      %p139 = scmp.eq.s32.totalorder %s17, 2
      %p140 = scmp.ne.s32.totalorder %s135, %s137
      %p141 = scmp.eq.s32.totalorder %s17, 0
      %p142 = por %p140, %p141
      %p143 = scmp.ne.s32.totalorder %s135, %s137
      %p144 = scmp.eq.s32.totalorder %s22, 2
      %p145 = por %p143, %p144
      %p146 = scmp.ne.s32.totalorder %s137, %s138
      %p147 = scmp.eq.s32.totalorder %s22, 0
      %p148 = por %p146, %p147
      %p149 = scmp.ne.s32.totalorder %s137, %s138
      %p150 = scmp.eq.s32.totalorder %s23, 2
      %p151 = por %p149, %p150
      %p153 = scmp.ne.s32.totalorder %s138, %s152
      %p154 = scmp.eq.s32.totalorder %s23, 0
      %p155 = por %p153, %p154
      %s157 = sadd.s32 %s156, 1
      %p160 = scmp.eq.s32.totalorder %s17, 2
      %p161 = scmp.ne.s32.totalorder %s156, %s158
      %p162 = scmp.eq.s32.totalorder %s17, 0
      %p163 = por %p161, %p162
      %p164 = scmp.ne.s32.totalorder %s156, %s158
      %p165 = scmp.eq.s32.totalorder %s22, 2
      %p166 = por %p164, %p165
      %p167 = scmp.ne.s32.totalorder %s158, %s159
      %p168 = scmp.eq.s32.totalorder %s22, 0
      %p169 = por %p167, %p168
      %p170 = scmp.ne.s32.totalorder %s158, %s159
      %p171 = scmp.eq.s32.totalorder %s23, 2
      %p172 = por %p170, %p171
      %p174 = scmp.ne.s32.totalorder %s159, %s173
      %p175 = scmp.eq.s32.totalorder %s23, 0
      %p176 = por %p174, %p175
      %s177 = ssub.s32 %s17, %s24
      %p178 = scmp.eq.s32.totalorder %s177, 0
      %s180 = sadd.s32 %s179, 1
      %s181 = scalar_select %p178, %s179, %s180
      %p184 = pneg %p178
      %p185 = scmp.eq.s32.totalorder %s17, 2
      %p186 = por %p184, %p185
      %p187 = scmp.ne.s32.totalorder %s179, %s182
      %p188 = scmp.eq.s32.totalorder %s17, 0
      %p189 = por %p187, %p188
      %p190 = scmp.ne.s32.totalorder %s179, %s182
      %p191 = scmp.eq.s32.totalorder %s22, 2
      %p192 = por %p190, %p191
      %p193 = scmp.ne.s32.totalorder %s182, %s183
      %p194 = scmp.eq.s32.totalorder %s22, 0
      %p195 = por %p193, %p194
      %p196 = scmp.ne.s32.totalorder %s182, %s183
      %p197 = scmp.eq.s32.totalorder %s23, 2
      %p198 = por %p196, %p197
      %p200 = scmp.ne.s32.totalorder %s183, %s199
      %p201 = scmp.eq.s32.totalorder %s23, 0
      %p202 = por %p200, %p201
      %p203 = scmp.le.s32.totalorder 1, %s17
      %p204 = scmp.lt.s32.totalorder %s17, 4
      %p205 = pnand %p203, %p204
      %p206 = pneg %p205
      // Predicated region
      $region9: #{tpu_custom_call.1} parent=5 // pred_check
        _
      $region10: #{tpu_custom_call.1} parent=5 // pred_check_branch
        %208 = sbr.rel (%p205) target = $region12
      $region11: #{tpu_custom_call.1} parent=5 // pred_region
        %s209 = ssub.s32 %s17, 1
        // Predicated region
        $region13: #{tpu_custom_call.1} parent=11 // pred_check
          %p210 = pneg %p64
        $region14: #{tpu_custom_call.1} parent=11 // pred_check_branch
          %212 = sbr.rel (%p210) target = $region16
        $region15: #{tpu_custom_call.1} parent=11 // pred_region
          _
        $region16: #{tpu_custom_call.1} parent=11 // pred_fallthru
          _
        // Predicated region
        $region17: #{tpu_custom_call.1} parent=11 // pred_check
          %p213 = pneg %p85
        $region18: #{tpu_custom_call.1} parent=11 // pred_check_branch
          %215 = sbr.rel (%p213) target = $region20
        $region19: #{tpu_custom_call.1} parent=11 // pred_region
          _
        $region20: #{tpu_custom_call.1} parent=11 // pred_fallthru
          _
        // Predicated region
        $region21: #{tpu_custom_call.1} parent=11 // pred_check
          %p216 = pneg %p106
        $region22: #{tpu_custom_call.1} parent=11 // pred_check_branch
          %218 = sbr.rel (%p216) target = $region24
        $region23: #{tpu_custom_call.1} parent=11 // pred_region
          _
        $region24: #{tpu_custom_call.1} parent=11 // pred_fallthru
          _
        // Predicated region
        $region25: #{tpu_custom_call.1} parent=11 // pred_check
          %p219 = pneg %p127
        $region26: #{tpu_custom_call.1} parent=11 // pred_check_branch
          %221 = sbr.rel (%p219) target = $region28
        $region27: #{tpu_custom_call.1} parent=11 // pred_region
          _
        $region28: #{tpu_custom_call.1} parent=11 // pred_fallthru
          _
        // Predicated region
        $region29: #{tpu_custom_call.1} parent=11 // pred_check
          %p222 = pneg %p148
        $region30: #{tpu_custom_call.1} parent=11 // pred_check_branch
          %224 = sbr.rel (%p222) target = $region32
        $region31: #{tpu_custom_call.1} parent=11 // pred_region
          _
        $region32: #{tpu_custom_call.1} parent=11 // pred_fallthru
          _
        // Predicated region
        $region33: #{tpu_custom_call.1} parent=11 // pred_check
          %p225 = pneg %p169
        $region34: #{tpu_custom_call.1} parent=11 // pred_check_branch
          %227 = sbr.rel (%p225) target = $region36
        $region35: #{tpu_custom_call.1} parent=11 // pred_region
          _
        $region36: #{tpu_custom_call.1} parent=11 // pred_fallthru
          _
      $region12: #{tpu_custom_call.1} parent=5 // pred_fallthru
        _
      %p228 = scmp.lt.s32.totalorder %s17, 3
      // Predicated region
      $region37: #{tpu_custom_call.1} parent=5 // pred_check
        %p229 = pneg %p228
      $region38: #{tpu_custom_call.1} parent=5 // pred_check_branch
        %231 = sbr.rel (%p229) target = $region40
      $region39: #{tpu_custom_call.1} parent=5 // pred_region
        // Predicated region
        $region41: #{tpu_custom_call.1} parent=39 // pred_check
          %p232 = pneg %p37
        $region42: #{tpu_custom_call.1} parent=39 // pred_check_branch
          %234 = sbr.rel (%p232) target = $region44
        $region43: #{tpu_custom_call.1} parent=39 // pred_region
          %s235 = smul.u32 16, %s17
          %p236 = scmp.lt.s32.totalorder %s235, 47
          %s237 = scalar_select %p236, %s235, 47
          %s238 = smul.addr %s237, 8
          %s239 = scalar_lea.vmem %s0, %s238
          %s240 = smul.u32 16, %s17
        $region44: #{tpu_custom_call.1} parent=39 // pred_fallthru
          _
      $region40: #{tpu_custom_call.1} parent=5 // pred_fallthru
        _
      %p241 = scmp.le.s32.totalorder 1, %s17
      %p242 = scmp.lt.s32.totalorder %s17, 4
      %p243 = pnand %p241, %p242
      %p244 = pneg %p243
      // Predicated region
      $region45: #{tpu_custom_call.1} parent=5 // pred_check
        _
      $region46: #{tpu_custom_call.1} parent=5 // pred_check_branch
        %246 = sbr.rel (%p243) target = $region48
      $region47: #{tpu_custom_call.1} parent=5 // pred_region
        %s247 = ssub.s32 %s17, 1
        %s248 = smul.u32 16, %s22
        %p249 = scmp.lt.s32.totalorder %s248, 47
        %s250 = scalar_select %p249, %s248, 47
        %s251 = smul.addr %s250, 8
        %s252 = scalar_lea.vmem %s0, %s251
        %p253 = pneg %p43
        %p254 = pneg %p40
        %p255 = pneg %p64
        %p256 = pneg %p61
        %p257 = pneg %p85
        %p258 = pneg %p82
        %p259 = pneg %p106
        %p260 = pneg %p103
        %p261 = pneg %p127
        %p262 = pneg %p124
        %p263 = pneg %p148
        %p264 = pneg %p145
        %p265 = pneg %p169
        %p266 = pneg %p166
        %p267 = pneg %p195
        %p268 = pneg %p192
        %s269 = sand.u32 %s182, 1
        %s270 = scalar_lea.sflag [#allocation4], %s269
        %s271 = sand.u32 %s182, 1
        %s272 = scalar_lea.vmem [#allocation3], %s271
        %s273 = smul.u32 16, %s22
        %p274 = scmp.lt.s32.totalorder %s273, 47
        %s275 = scalar_select %p274, %s273, 47
        %s276 = smul.addr %s275, 8
        %s277 = scalar_lea.vmem %s0, %s276
        %s278 = smul.u32 16, %s22
        %v279 = vld [vmem:[%s277] sm:$0xff]
        %v280 = vld [vmem:[%s277 + $0x8] sm:$0xff]
        %v281 = vld [vmem:[%s277 + $0x10] sm:$0xff]
        %v282 = vld [vmem:[%s277 + $0x18] sm:$0xff]
        %v283 = vld [vmem:[%s277 + $0x20] sm:$0xff]
        %v284 = vld [vmem:[%s277 + $0x28] sm:$0xff]
        %v285 = vld [vmem:[%s277 + $0x30] sm:$0xff]
        %v286 = vld [vmem:[%s277 + $0x38] sm:$0xff]
        %v287 = vld [vmem:[%s277 + $0x40] sm:$0xff]
        %v288 = vld [vmem:[%s277 + $0x48] sm:$0xff]
        %v289 = vld [vmem:[%s277 + $0x50] sm:$0xff]
        %v290 = vld [vmem:[%s277 + $0x58] sm:$0xff]
        %v291 = vld [vmem:[%s277 + $0x60] sm:$0xff]
        %v292 = vld [vmem:[%s277 + $0x68] sm:$0xff]
        %v293 = vld [vmem:[%s277 + $0x70] sm:$0xff]
        %v294 = vld [vmem:[%s277 + $0x78] sm:$0xff]
        %v295 = vld [vmem:[%s1] sm:$0xff]
        %v296 = vld [vmem:[%s1 + $0x8] sm:$0xff]
        %v297 = vld [vmem:[%s2] sm:$0x1]
        %v299 = vlaneseq
        %v300 = vshrl.u32 %v299, 7
        %v301 = vsub.s32 0, %v300
        %v302 = vrot.slane %v297, %v301
        %vm304 = vcmask 130048
        %v306 = vsel %vm304, %v279, 0
        %v309 = vsel %vm304, %v280, 0
        %v312 = vsel %vm304, %v281, 0
        %v315 = vsel %vm304, %v282, 0
        %v318 = vsel %vm304, %v283, 0
        %v321 = vsel %vm304, %v284, 0
        %v324 = vsel %vm304, %v285, 0
        %v327 = vsel %vm304, %v286, 0
        %v330 = vsel %vm304, %v287, 0
        %v333 = vsel %vm304, %v288, 0
        %v336 = vsel %vm304, %v289, 0
        %v339 = vsel %vm304, %v290, 0
        %v342 = vsel %vm304, %v291, 0
        %v345 = vsel %vm304, %v292, 0
        %v348 = vsel %vm304, %v293, 0
        %v351 = vsel %vm304, %v294, 0
        %353 = vmatprep.subr.mxu0 0.0
        %354 = vmatpush1.msra.mxu0 %v295
        %355 = vmatprep.subr.mxu0 0.0
        %356 = vmatpush1.msra.mxu0 %v296
        %357 = vmatprep.subr.mxu0 0.0
        %358 = vmatpush1.msra.mxu0 0.0
        %359 = vmatprep.subr.mxu0 0.0
        %360 = vmatpush1.msra.mxu0 0.0
        %361 = vmatprep.subr.mxu0 0.0
        %362 = vmatpush1.msra.mxu0 0.0
        %363 = vmatprep.subr.mxu0 0.0
        %364 = vmatpush1.msra.mxu0 0.0
        %365 = vmatprep.subr.mxu0 0.0
        %366 = vmatpush1.msra.mxu0 0.0
        %367 = vmatprep.subr.mxu0 0.0
        %368 = vmatpush1.msra.mxu0 0.0
        %369 = vmatprep.subr.mxu0 0.0
        %370 = vmatpush1.msra.mxu0 0.0
        %371 = vmatprep.subr.mxu0 0.0
        %372 = vmatpush1.msra.mxu0 0.0
        %373 = vmatprep.subr.mxu0 0.0
        %374 = vmatpush1.msra.mxu0 0.0
        %375 = vmatprep.subr.mxu0 0.0
        %376 = vmatpush1.msra.mxu0 0.0
        %377 = vmatprep.subr.mxu0 0.0
        %378 = vmatpush1.msra.mxu0 0.0
        %379 = vmatprep.subr.mxu0 0.0
        %380 = vmatpush1.msra.mxu0 0.0
        %381 = vmatprep.subr.mxu0 0.0
        %382 = vmatpush1.msra.mxu0 0.0
        %383 = vmatprep.subr.mxu0 0.0
        %384 = vmatpush1.msra.mxu0 0.0
        %385 = vmatprep.subr.mxu0 0.0
        %386 = vmatpush1.msra.mxu0 0.0
        %387 = vmatprep.subr.mxu0 0.0
        %388 = vmatpush1.msra.mxu0 0.0
        %389 = vmatprep.subr.mxu0 0.0
        %390 = vmatpush1.msra.mxu0 0.0
        %391 = vmatprep.subr.mxu0 0.0
        %392 = vmatpush1.msra.mxu0 0.0
        %393 = vmatprep.subr.mxu0 0.0
        %394 = vmatpush1.msra.mxu0 0.0
        %395 = vmatprep.subr.mxu0 0.0
        %396 = vmatpush1.msra.mxu0 0.0
        %397 = vmatprep.subr.mxu0 0.0
        %398 = vmatpush1.msra.mxu0 0.0
        %399 = vmatprep.subr.mxu0 0.0
        %400 = vmatpush1.msra.mxu0 0.0
        %401 = vmatprep.subr.mxu0 0.0
        %402 = vmatpush1.msra.mxu0 0.0
        %403 = vmatprep.subr.mxu0 0.0
        %404 = vmatpush1.msra.mxu0 0.0
        %405 = vmatprep.subr.mxu0 0.0
        %406 = vmatpush1.msra.mxu0 0.0
        %407 = vmatprep.subr.mxu0 0.0
        %408 = vmatpush1.msra.mxu0 0.0
        %409 = vmatprep.subr.mxu0 0.0
        %410 = vmatpush1.msra.mxu0 0.0
        %411 = vmatprep.subr.mxu0 0.0
        %412 = vmatpush1.msra.mxu0 0.0
        %413 = vmatprep.subr.mxu0 0.0
        %414 = vmatpush1.msra.mxu0 0.0
        %415 = vmatprep.subr.mxu0 0.0
        %416 = vmatpush1.msra.mxu0 0.0
        %417 = vmatprep.mubr.f32.mxu0 0.0
        %418 = vmatmul.mubr.f32.gmra.mrb[0].mxu0 %v306
        %v419 = vpop.f32.mrb[0].mxu0
        %v420 = vadd.f32 %v302, %v419
        %v421 = vpop.f32.mrb[0].mxu0
        %422 = vmatprep.mubr.f32.mxu0 0.0
        %423 = vmatmul.mubr.f32.gmra.mrb[0].mxu0 %v309
        %v424 = vpop.f32.mrb[0].mxu0
        %v425 = vadd.f32 %v302, %v424
        %v426 = vpop.f32.mrb[0].mxu0
        %427 = vmatprep.mubr.f32.mxu0 0.0
        %428 = vmatmul.mubr.f32.gmra.mrb[0].mxu0 %v312
        %v429 = vpop.f32.mrb[0].mxu0
        %v430 = vadd.f32 %v302, %v429
        %v431 = vpop.f32.mrb[0].mxu0
        %432 = vmatprep.mubr.f32.mxu0 0.0
        %433 = vmatmul.mubr.f32.gmra.mrb[0].mxu0 %v315
        %v434 = vpop.f32.mrb[0].mxu0
        %v435 = vadd.f32 %v302, %v434
        %v436 = vpop.f32.mrb[0].mxu0
        %437 = vmatprep.mubr.f32.mxu0 0.0
        %438 = vmatmul.mubr.f32.gmra.mrb[0].mxu0 %v318
        %v439 = vpop.f32.mrb[0].mxu0
        %v440 = vadd.f32 %v302, %v439
        %v441 = vpop.f32.mrb[0].mxu0
        %442 = vmatprep.mubr.f32.mxu0 0.0
        %443 = vmatmul.mubr.f32.gmra.mrb[0].mxu0 %v321
        %v444 = vpop.f32.mrb[0].mxu0
        %v445 = vadd.f32 %v302, %v444
        %v446 = vpop.f32.mrb[0].mxu0
        %447 = vmatprep.mubr.f32.mxu0 0.0
        %448 = vmatmul.mubr.f32.gmra.mrb[0].mxu0 %v324
        %v449 = vpop.f32.mrb[0].mxu0
        %v450 = vadd.f32 %v302, %v449
        %v451 = vpop.f32.mrb[0].mxu0
        %452 = vmatprep.mubr.f32.mxu0 0.0
        %453 = vmatmul.mubr.f32.gmra.mrb[0].mxu0 %v327
        %v454 = vpop.f32.mrb[0].mxu0
        %v455 = vadd.f32 %v302, %v454
        %v456 = vpop.f32.mrb[0].mxu0
        %457 = vmatprep.mubr.f32.mxu0 0.0
        %458 = vmatmul.mubr.f32.gmra.mrb[0].mxu0 %v330
        %v459 = vpop.f32.mrb[0].mxu0
        %v460 = vadd.f32 %v302, %v459
        %v461 = vpop.f32.mrb[0].mxu0
        %462 = vmatprep.mubr.f32.mxu0 0.0
        %463 = vmatmul.mubr.f32.gmra.mrb[0].mxu0 %v333
        %v464 = vpop.f32.mrb[0].mxu0
        %v465 = vadd.f32 %v302, %v464
        %v466 = vpop.f32.mrb[0].mxu0
        %467 = vmatprep.mubr.f32.mxu0 0.0
        %468 = vmatmul.mubr.f32.gmra.mrb[0].mxu0 %v336
        %v469 = vpop.f32.mrb[0].mxu0
        %v470 = vadd.f32 %v302, %v469
        %v471 = vpop.f32.mrb[0].mxu0
        %472 = vmatprep.mubr.f32.mxu0 0.0
        %473 = vmatmul.mubr.f32.gmra.mrb[0].mxu0 %v339
        %v474 = vpop.f32.mrb[0].mxu0
        %v475 = vadd.f32 %v302, %v474
        %v476 = vpop.f32.mrb[0].mxu0
        %477 = vmatprep.mubr.f32.mxu0 0.0
        %478 = vmatmul.mubr.f32.gmra.mrb[0].mxu0 %v342
        %v479 = vpop.f32.mrb[0].mxu0
        %v480 = vadd.f32 %v302, %v479
        %v481 = vpop.f32.mrb[0].mxu0
        %482 = vmatprep.mubr.f32.mxu0 0.0
        %483 = vmatmul.mubr.f32.gmra.mrb[0].mxu0 %v345
        %v484 = vpop.f32.mrb[0].mxu0
        %v485 = vadd.f32 %v302, %v484
        %v486 = vpop.f32.mrb[0].mxu0
        %487 = vmatprep.mubr.f32.mxu0 0.0
        %488 = vmatmul.mubr.f32.gmra.mrb[0].mxu0 %v348
        %v489 = vpop.f32.mrb[0].mxu0
        %v490 = vadd.f32 %v302, %v489
        %v491 = vpop.f32.mrb[0].mxu0
        %492 = vmatprep.mubr.f32.mxu0 0.0
        %493 = vmatmul.mubr.f32.gmra.mrb[0].mxu0 %v351
        %v494 = vpop.f32.mrb[0].mxu0
        %v495 = vadd.f32 %v302, %v494
        %v496 = vpop.f32.mrb[0].mxu0
        %497 = vdwg.mxu0
        %v498 = vmax.f32 %v420, 0.0
        %v499 = vmax.f32 %v425, 0.0
        %v500 = vmax.f32 %v430, 0.0
        %v501 = vmax.f32 %v435, 0.0
        %v502 = vmax.f32 %v440, 0.0
        %v503 = vmax.f32 %v445, 0.0
        %v504 = vmax.f32 %v450, 0.0
        %v505 = vmax.f32 %v455, 0.0
        %v506 = vmax.f32 %v460, 0.0
        %v507 = vmax.f32 %v465, 0.0
        %v508 = vmax.f32 %v470, 0.0
        %v509 = vmax.f32 %v475, 0.0
        %v510 = vmax.f32 %v480, 0.0
        %v511 = vmax.f32 %v485, 0.0
        %v512 = vmax.f32 %v490, 0.0
        %v513 = vmax.f32 %v495, 0.0
        %v514 = vld [vmem:[%s3] sm:$0xff]
        %v515 = vld [vmem:[%s3 + $0x8] sm:$0xff]
        %v516 = vld [vmem:[%s3 + $0x10] sm:$0xff]
        %v517 = vld [vmem:[%s3 + $0x18] sm:$0xff]
        %v518 = vld [vmem:[%s4] sm:$0x1]
        %v520 = vlaneseq
        %v521 = vshrl.u32 %v520, 7
        %v522 = vsub.s32 0, %v521
        %v523 = vrot.slane %v518, %v522
        %vm525 = vcmask 261120
        %v527 = vsel %vm525, %v498, 0
        %v530 = vsel %vm525, %v499, 0
        %v533 = vsel %vm525, %v500, 0
        %v536 = vsel %vm525, %v501, 0
        %v539 = vsel %vm525, %v502, 0
        %v542 = vsel %vm525, %v503, 0
        %v545 = vsel %vm525, %v504, 0
        %v548 = vsel %vm525, %v505, 0
        %v551 = vsel %vm525, %v506, 0
        %v554 = vsel %vm525, %v507, 0
        %v557 = vsel %vm525, %v508, 0
        %v560 = vsel %vm525, %v509, 0
        %v563 = vsel %vm525, %v510, 0
        %v566 = vsel %vm525, %v511, 0
        %v569 = vsel %vm525, %v512, 0
        %v572 = vsel %vm525, %v513, 0
        %574 = vmatprep.subr.mxu0 0.0
        %575 = vmatpush1.msra.mxu0 %v514
        %576 = vmatprep.subr.mxu0 0.0
        %577 = vmatpush1.msra.mxu0 %v515
        %578 = vmatprep.subr.mxu0 0.0
        %579 = vmatpush1.msra.mxu0 %v516
        %580 = vmatprep.subr.mxu0 0.0
        %581 = vmatpush1.msra.mxu0 %v517
        %582 = vmatprep.subr.mxu0 0.0
        %583 = vmatpush1.msra.mxu0 0.0
        %584 = vmatprep.subr.mxu0 0.0
        %585 = vmatpush1.msra.mxu0 0.0
        %586 = vmatprep.subr.mxu0 0.0
        %587 = vmatpush1.msra.mxu0 0.0
        %588 = vmatprep.subr.mxu0 0.0
        %589 = vmatpush1.msra.mxu0 0.0
        %590 = vmatprep.subr.mxu0 0.0
        %591 = vmatpush1.msra.mxu0 0.0
        %592 = vmatprep.subr.mxu0 0.0
        %593 = vmatpush1.msra.mxu0 0.0
        %594 = vmatprep.subr.mxu0 0.0
        %595 = vmatpush1.msra.mxu0 0.0
        %596 = vmatprep.subr.mxu0 0.0
        %597 = vmatpush1.msra.mxu0 0.0
        %598 = vmatprep.subr.mxu0 0.0
        %599 = vmatpush1.msra.mxu0 0.0
        %600 = vmatprep.subr.mxu0 0.0
        %601 = vmatpush1.msra.mxu0 0.0
        %602 = vmatprep.subr.mxu0 0.0
        %603 = vmatpush1.msra.mxu0 0.0
        %604 = vmatprep.subr.mxu0 0.0
        %605 = vmatpush1.msra.mxu0 0.0
        %606 = vmatprep.subr.mxu0 0.0
        %607 = vmatpush1.msra.mxu0 0.0
        %608 = vmatprep.subr.mxu0 0.0
        %609 = vmatpush1.msra.mxu0 0.0
        %610 = vmatprep.subr.mxu0 0.0
        %611 = vmatpush1.msra.mxu0 0.0
        %612 = vmatprep.subr.mxu0 0.0
        %613 = vmatpush1.msra.mxu0 0.0
        %614 = vmatprep.subr.mxu0 0.0
        %615 = vmatpush1.msra.mxu0 0.0
        %616 = vmatprep.subr.mxu0 0.0
        %617 = vmatpush1.msra.mxu0 0.0
        %618 = vmatprep.subr.mxu0 0.0
        %619 = vmatpush1.msra.mxu0 0.0
        %620 = vmatprep.subr.mxu0 0.0
        %621 = vmatpush1.msra.mxu0 0.0
        %622 = vmatprep.subr.mxu0 0.0
        %623 = vmatpush1.msra.mxu0 0.0
        %624 = vmatprep.subr.mxu0 0.0
        %625 = vmatpush1.msra.mxu0 0.0
        %626 = vmatprep.subr.mxu0 0.0
        %627 = vmatpush1.msra.mxu0 0.0
        %628 = vmatprep.subr.mxu0 0.0
        %629 = vmatpush1.msra.mxu0 0.0
        %630 = vmatprep.subr.mxu0 0.0
        %631 = vmatpush1.msra.mxu0 0.0
        %632 = vmatprep.subr.mxu0 0.0
        %633 = vmatpush1.msra.mxu0 0.0
        %634 = vmatprep.subr.mxu0 0.0
        %635 = vmatpush1.msra.mxu0 0.0
        %636 = vmatprep.subr.mxu0 0.0
        %637 = vmatpush1.msra.mxu0 0.0
        %638 = vmatprep.mubr.f32.mxu0 0.0
        %639 = vmatmul.mubr.f32.gmra.mrb[0].mxu0 %v527
        %v640 = vpop.f32.mrb[0].mxu0
        %v641 = vadd.f32 %v523, %v640
        %v642 = vpop.f32.mrb[0].mxu0
        %643 = vmatprep.mubr.f32.mxu0 0.0
        %644 = vmatmul.mubr.f32.gmra.mrb[0].mxu0 %v530
        %v645 = vpop.f32.mrb[0].mxu0
        %v646 = vadd.f32 %v523, %v645
        %v647 = vpop.f32.mrb[0].mxu0
        %648 = vmatprep.mubr.f32.mxu0 0.0
        %649 = vmatmul.mubr.f32.gmra.mrb[0].mxu0 %v533
        %v650 = vpop.f32.mrb[0].mxu0
        %v651 = vadd.f32 %v523, %v650
        %v652 = vpop.f32.mrb[0].mxu0
        %653 = vmatprep.mubr.f32.mxu0 0.0
        %654 = vmatmul.mubr.f32.gmra.mrb[0].mxu0 %v536
        %v655 = vpop.f32.mrb[0].mxu0
        %v656 = vadd.f32 %v523, %v655
        %v657 = vpop.f32.mrb[0].mxu0
        %658 = vmatprep.mubr.f32.mxu0 0.0
        %659 = vmatmul.mubr.f32.gmra.mrb[0].mxu0 %v539
        %v660 = vpop.f32.mrb[0].mxu0
        %v661 = vadd.f32 %v523, %v660
        %v662 = vpop.f32.mrb[0].mxu0
        %663 = vmatprep.mubr.f32.mxu0 0.0
        %664 = vmatmul.mubr.f32.gmra.mrb[0].mxu0 %v542
        %v665 = vpop.f32.mrb[0].mxu0
        %v666 = vadd.f32 %v523, %v665
        %v667 = vpop.f32.mrb[0].mxu0
        %668 = vmatprep.mubr.f32.mxu0 0.0
        %669 = vmatmul.mubr.f32.gmra.mrb[0].mxu0 %v545
        %v670 = vpop.f32.mrb[0].mxu0
        %v671 = vadd.f32 %v523, %v670
        %v672 = vpop.f32.mrb[0].mxu0
        %673 = vmatprep.mubr.f32.mxu0 0.0
        %674 = vmatmul.mubr.f32.gmra.mrb[0].mxu0 %v548
        %v675 = vpop.f32.mrb[0].mxu0
        %v676 = vadd.f32 %v523, %v675
        %v677 = vpop.f32.mrb[0].mxu0
        %678 = vmatprep.mubr.f32.mxu0 0.0
        %679 = vmatmul.mubr.f32.gmra.mrb[0].mxu0 %v551
        %v680 = vpop.f32.mrb[0].mxu0
        %v681 = vadd.f32 %v523, %v680
        %v682 = vpop.f32.mrb[0].mxu0
        %683 = vmatprep.mubr.f32.mxu0 0.0
        %684 = vmatmul.mubr.f32.gmra.mrb[0].mxu0 %v554
        %v685 = vpop.f32.mrb[0].mxu0
        %v686 = vadd.f32 %v523, %v685
        %v687 = vpop.f32.mrb[0].mxu0
        %688 = vmatprep.mubr.f32.mxu0 0.0
        %689 = vmatmul.mubr.f32.gmra.mrb[0].mxu0 %v557
        %v690 = vpop.f32.mrb[0].mxu0
        %v691 = vadd.f32 %v523, %v690
        %v692 = vpop.f32.mrb[0].mxu0
        %693 = vmatprep.mubr.f32.mxu0 0.0
        %694 = vmatmul.mubr.f32.gmra.mrb[0].mxu0 %v560
        %v695 = vpop.f32.mrb[0].mxu0
        %v696 = vadd.f32 %v523, %v695
        %v697 = vpop.f32.mrb[0].mxu0
        %698 = vmatprep.mubr.f32.mxu0 0.0
        %699 = vmatmul.mubr.f32.gmra.mrb[0].mxu0 %v563
        %v700 = vpop.f32.mrb[0].mxu0
        %v701 = vadd.f32 %v523, %v700
        %v702 = vpop.f32.mrb[0].mxu0
        %703 = vmatprep.mubr.f32.mxu0 0.0
        %704 = vmatmul.mubr.f32.gmra.mrb[0].mxu0 %v566
        %v705 = vpop.f32.mrb[0].mxu0
        %v706 = vadd.f32 %v523, %v705
        %v707 = vpop.f32.mrb[0].mxu0
        %708 = vmatprep.mubr.f32.mxu0 0.0
        %709 = vmatmul.mubr.f32.gmra.mrb[0].mxu0 %v569
        %v710 = vpop.f32.mrb[0].mxu0
        %v711 = vadd.f32 %v523, %v710
        %v712 = vpop.f32.mrb[0].mxu0
        %713 = vmatprep.mubr.f32.mxu0 0.0
        %714 = vmatmul.mubr.f32.gmra.mrb[0].mxu0 %v572
        %v715 = vpop.f32.mrb[0].mxu0
        %v716 = vadd.f32 %v523, %v715
        %v717 = vpop.f32.mrb[0].mxu0
        %718 = vdwg.mxu0
        %v719 = vmax.f32 %v641, 0.0
        %v720 = vmax.f32 %v646, 0.0
        %v721 = vmax.f32 %v651, 0.0
        %v722 = vmax.f32 %v656, 0.0
        %v723 = vmax.f32 %v661, 0.0
        %v724 = vmax.f32 %v666, 0.0
        %v725 = vmax.f32 %v671, 0.0
        %v726 = vmax.f32 %v676, 0.0
        %v727 = vmax.f32 %v681, 0.0
        %v728 = vmax.f32 %v686, 0.0
        %v729 = vmax.f32 %v691, 0.0
        %v730 = vmax.f32 %v696, 0.0
        %v731 = vmax.f32 %v701, 0.0
        %v732 = vmax.f32 %v706, 0.0
        %v733 = vmax.f32 %v711, 0.0
        %v734 = vmax.f32 %v716, 0.0
        %v735 = vld [vmem:[%s5] sm:$0x1]
        %v737 = vlaneseq
        %v738 = vshrl.u32 %v737, 7
        %v739 = vsub.s32 0, %v738
        %v740 = vrot.slane %v735, %v739
        %v742 = vmul.f32 %v719, %v740
        %v743 = vmul.f32 %v720, %v740
        %v744 = vmul.f32 %v721, %v740
        %v745 = vmul.f32 %v722, %v740
        %v746 = vmul.f32 %v723, %v740
        %v747 = vmul.f32 %v724, %v740
        %v748 = vmul.f32 %v725, %v740
        %v749 = vmul.f32 %v726, %v740
        %v750 = vmul.f32 %v727, %v740
        %v751 = vmul.f32 %v728, %v740
        %v752 = vmul.f32 %v729, %v740
        %v753 = vmul.f32 %v730, %v740
        %v754 = vmul.f32 %v731, %v740
        %v755 = vmul.f32 %v732, %v740
        %v756 = vmul.f32 %v733, %v740
        %v757 = vmul.f32 %v734, %v740
        %v758 = vsel %vm304, %v742, 0.0
        %759 = vadd.xlane.f32.xlu0 %v758
        %v760 = vpop.xlane.xlu0 %759
        %v761 = vsel %vm304, %v743, 0.0
        %762 = vadd.xlane.f32.xlu0 %v761
        %v763 = vpop.xlane.xlu0 %762
        %v764 = vsel %vm304, %v744, 0.0
        %765 = vadd.xlane.f32.xlu0 %v764
        %v766 = vpop.xlane.xlu0 %765
        %v767 = vsel %vm304, %v745, 0.0
        %768 = vadd.xlane.f32.xlu0 %v767
        %v769 = vpop.xlane.xlu0 %768
        %v770 = vsel %vm304, %v746, 0.0
        %771 = vadd.xlane.f32.xlu0 %v770
        %v772 = vpop.xlane.xlu0 %771
        %v773 = vsel %vm304, %v747, 0.0
        %774 = vadd.xlane.f32.xlu0 %v773
        %v775 = vpop.xlane.xlu0 %774
        %v776 = vsel %vm304, %v748, 0.0
        %777 = vadd.xlane.f32.xlu0 %v776
        %v778 = vpop.xlane.xlu0 %777
        %v779 = vsel %vm304, %v749, 0.0
        %780 = vadd.xlane.f32.xlu0 %v779
        %v781 = vpop.xlane.xlu0 %780
        %v782 = vsel %vm304, %v750, 0.0
        %783 = vadd.xlane.f32.xlu0 %v782
        %v784 = vpop.xlane.xlu0 %783
        %v785 = vsel %vm304, %v751, 0.0
        %786 = vadd.xlane.f32.xlu0 %v785
        %v787 = vpop.xlane.xlu0 %786
        %v788 = vsel %vm304, %v752, 0.0
        %789 = vadd.xlane.f32.xlu0 %v788
        %v790 = vpop.xlane.xlu0 %789
        %v791 = vsel %vm304, %v753, 0.0
        %792 = vadd.xlane.f32.xlu0 %v791
        %v793 = vpop.xlane.xlu0 %792
        %v794 = vsel %vm304, %v754, 0.0
        %795 = vadd.xlane.f32.xlu0 %v794
        %v796 = vpop.xlane.xlu0 %795
        %v797 = vsel %vm304, %v755, 0.0
        %798 = vadd.xlane.f32.xlu0 %v797
        %v799 = vpop.xlane.xlu0 %798
        %v800 = vsel %vm304, %v756, 0.0
        %801 = vadd.xlane.f32.xlu0 %v800
        %v802 = vpop.xlane.xlu0 %801
        %v803 = vsel %vm304, %v757, 0.0
        %804 = vadd.xlane.f32.xlu0 %v803
        %v805 = vpop.xlane.xlu0 %804
        %s806 = sld [smem:[#allocation2]]
        %v807 = vstv %s806
        %v808 = vadd.f32 %v760, %v807
        %v809 = vadd.f32 %v763, %v807
        %v810 = vadd.f32 %v766, %v807
        %v811 = vadd.f32 %v769, %v807
        %v812 = vadd.f32 %v772, %v807
        %v813 = vadd.f32 %v775, %v807
        %v814 = vadd.f32 %v778, %v807
        %v815 = vadd.f32 %v781, %v807
        %v816 = vadd.f32 %v784, %v807
        %v817 = vadd.f32 %v787, %v807
        %v818 = vadd.f32 %v790, %v807
        %v819 = vadd.f32 %v793, %v807
        %v820 = vadd.f32 %v796, %v807
        %v821 = vadd.f32 %v799, %v807
        %v822 = vadd.f32 %v802, %v807
        %v823 = vadd.f32 %v805, %v807
        %v840 = vlaneseq
        %v841 = vand.u32 %v840, 127
        %v842 = vlaneseq
        %v843 = vshrl.u32 %v842, 7
        %v844 = vsub.s32 %v841, %v843
        %v845 = vrot.slane %v808, %v844
        %v846 = vadd.s32 %v841, 4294967288
        %v847 = vlaneseq
        %v848 = vshrl.u32 %v847, 7
        %v849 = vsub.s32 %v846, %v848
        %v850 = vrot.slane %v809, %v849
        %vm851 = vcmask 130112
        %v852 = vsel %vm851, %v850, %v845
        %v853 = vadd.s32 %v841, 4294967280
        %v854 = vlaneseq
        %v855 = vshrl.u32 %v854, 7
        %v856 = vsub.s32 %v853, %v855
        %v857 = vrot.slane %v810, %v856
        %vm858 = vcmask 195712
        %v859 = vsel %vm858, %v857, %v852
        %v860 = vadd.s32 %v841, 4294967272
        %v861 = vlaneseq
        %v862 = vshrl.u32 %v861, 7
        %v863 = vsub.s32 %v860, %v862
        %v864 = vrot.slane %v811, %v863
        %vm865 = vcmask 261312
        %v866 = vsel %vm865, %v864, %v859
        %v867 = vadd.s32 %v841, 4294967264
        %v868 = vlaneseq
        %v869 = vshrl.u32 %v868, 7
        %v870 = vsub.s32 %v867, %v869
        %v871 = vrot.slane %v812, %v870
        %vm872 = vcmask 326912
        %v873 = vsel %vm872, %v871, %v866
        %v874 = vadd.s32 %v841, 4294967256
        %v875 = vlaneseq
        %v876 = vshrl.u32 %v875, 7
        %v877 = vsub.s32 %v874, %v876
        %v878 = vrot.slane %v813, %v877
        %vm879 = vcmask 392512
        %v880 = vsel %vm879, %v878, %v873
        %v881 = vadd.s32 %v841, 4294967248
        %v882 = vlaneseq
        %v883 = vshrl.u32 %v882, 7
        %v884 = vsub.s32 %v881, %v883
        %v885 = vrot.slane %v814, %v884
        %vm886 = vcmask 458112
        %v887 = vsel %vm886, %v885, %v880
        %v888 = vadd.s32 %v841, 4294967240
        %v889 = vlaneseq
        %v890 = vshrl.u32 %v889, 7
        %v891 = vsub.s32 %v888, %v890
        %v892 = vrot.slane %v815, %v891
        %vm893 = vcmask 523712
        %v894 = vsel %vm893, %v892, %v887
        %v895 = vadd.s32 %v841, 4294967232
        %v896 = vlaneseq
        %v897 = vshrl.u32 %v896, 7
        %v898 = vsub.s32 %v895, %v897
        %v899 = vrot.slane %v816, %v898
        %vm900 = vcmask 589312
        %v901 = vsel %vm900, %v899, %v894
        %v902 = vadd.s32 %v841, 4294967224
        %v903 = vlaneseq
        %v904 = vshrl.u32 %v903, 7
        %v905 = vsub.s32 %v902, %v904
        %v906 = vrot.slane %v817, %v905
        %vm907 = vcmask 654912
        %v908 = vsel %vm907, %v906, %v901
        %v909 = vadd.s32 %v841, 4294967216
        %v910 = vlaneseq
        %v911 = vshrl.u32 %v910, 7
        %v912 = vsub.s32 %v909, %v911
        %v913 = vrot.slane %v818, %v912
        %vm914 = vcmask 720512
        %v915 = vsel %vm914, %v913, %v908
        %v916 = vadd.s32 %v841, 4294967208
        %v917 = vlaneseq
        %v918 = vshrl.u32 %v917, 7
        %v919 = vsub.s32 %v916, %v918
        %v920 = vrot.slane %v819, %v919
        %vm921 = vcmask 786112
        %v922 = vsel %vm921, %v920, %v915
        %v923 = vadd.s32 %v841, 4294967200
        %v924 = vlaneseq
        %v925 = vshrl.u32 %v924, 7
        %v926 = vsub.s32 %v923, %v925
        %v927 = vrot.slane %v820, %v926
        %vm928 = vcmask 851712
        %v929 = vsel %vm928, %v927, %v922
        %v930 = vadd.s32 %v841, 4294967192
        %v931 = vlaneseq
        %v932 = vshrl.u32 %v931, 7
        %v933 = vsub.s32 %v930, %v932
        %v934 = vrot.slane %v821, %v933
        %vm935 = vcmask 917312
        %v936 = vsel %vm935, %v934, %v929
        %v937 = vadd.s32 %v841, 4294967184
        %v938 = vlaneseq
        %v939 = vshrl.u32 %v938, 7
        %v940 = vsub.s32 %v937, %v939
        %v941 = vrot.slane %v822, %v940
        %vm942 = vcmask 982912
        %v943 = vsel %vm942, %v941, %v936
        %v944 = vadd.s32 %v841, 4294967176
        %v945 = vlaneseq
        %v946 = vshrl.u32 %v945, 7
        %v947 = vsub.s32 %v944, %v946
        %v948 = vrot.slane %v823, %v947
        %vm949 = vcmask 1048512
        %v950 = vsel %vm949, %v948, %v943
        %952 = vst [vmem:[%s272] sm:$0x1] %v950
        %s953 = sand.u32 %s182, 1
        %s954 = scalar_lea.sflag [#allocation4], %s953
        %s955 = sand.u32 %s182, 1
        %s956 = scalar_lea.vmem [#allocation3], %s955
        // Predicated region
        $region49: #{tpu_custom_call.1} parent=47 // pred_check
          %p957 = pneg %p192
        $region50: #{tpu_custom_call.1} parent=47 // pred_check_branch
          %959 = sbr.rel (%p957) target = $region52
        $region51: #{tpu_custom_call.1} parent=47 // pred_region
          %s961 = ssub.s32 16, 16
          %962 = vsyncadd %s954, %s961
          %s963 = smul.addr %s22, 16
          %s964 = scalar_lea.hbm %s7, %s963
          %s966 = sshll.u32 %s956, 4
          %s967 = int_to_ptr.vmem [resolvable:$true] %s966
          %969 = dma.vmem_to_hbm [thread:$0]  %s967, 16, %s964, %s954
        $region52: #{tpu_custom_call.1} parent=47 // pred_fallthru
          _
      $region48: #{tpu_custom_call.1} parent=5 // pred_fallthru
        _
      %p970 = scmp.le.s32.totalorder 2, %s17
      // Predicated region
      $region53: #{tpu_custom_call.1} parent=5 // pred_check
        %p971 = pneg %p970
      $region54: #{tpu_custom_call.1} parent=5 // pred_check_branch
        %973 = sbr.rel (%p971) target = $region56
      $region55: #{tpu_custom_call.1} parent=5 // pred_region
        %s974 = ssub.s32 %s17, 2
        // Predicated region
        $region57: #{tpu_custom_call.1} parent=55 // pred_check
          %p975 = pneg %p198
        $region58: #{tpu_custom_call.1} parent=55 // pred_check_branch
          %977 = sbr.rel (%p975) target = $region60
        $region59: #{tpu_custom_call.1} parent=55 // pred_region
          %s978 = sand.u32 %s183, 1
          %s979 = scalar_lea.sflag [#allocation4], %s978
          %s980 = sand.u32 %s183, 1
          %s981 = scalar_lea.vmem [#allocation3], %s980
          %982 = dma.done %s979, 16
        $region60: #{tpu_custom_call.1} parent=55 // pred_fallthru
          _
      $region56: #{tpu_custom_call.1} parent=5 // pred_fallthru
        _
    $region6: #{tpu_custom_call.1} parent=1 // loop_footer
      %s21 = sadd.s32 1, %s17
    $region7: #{tpu_custom_call.1} parent=1 // loop_footer_branch
      %16 = sbr.rel target = $region3
    $region8: #{tpu_custom_call.1} parent=1 // loop_exit
      _
    %983 = vsyncpa [#allocation4], 1
    %s984 = scalar_lea.sflag [#allocation4], 1
    %985 = vsyncpa %s984, 1

</llo_original>
